<compile_context>
chip_gen: v6e
topology: v6e:2x2x1
jax: 0.10.0
libtpu: 0.0.40
codegen_flags: <defaults>
</compile_context>

<pallas_src>
import jax
import jax.numpy as jnp
import numpy as np
from jax.experimental import pallas as pl
from jax.experimental.pallas import tpu as pltpu


HIDDEN = 64            # MLPBase hidden_size default
OBS_DIM = 22           # small 1-D observation (tiltrotor-style state vector)
BATCH = 8              # act()-sized batch
LARGE_BATCH = 2048     # evaluate_actions / rollout-sized batch
_SUBLANE = 8
_GRIDLESS_MAX_BATCH = 1024   # <= this: single invocation, whole slab in VMEM
_BATCH_TILE = 512            # > that: 1-D batch grid with TB-row tiles


def _round_up(x, m):
    return ((x + m - 1) // m) * m


def _policy_fused_kernel(x_ref, w1_ref, w2_ref, misc_ref, out_ref):
    """Fused actor / critic / value head for MLPBase('default').

    x_ref    : (TB, OBS_PAD)   zero-padded observations (one batch tile)
    w1_ref   : (OBS_PAD, 2H)   [ wa1 | wc1 ]   lane-concatenated (128 lanes)
    w2_ref   : (2H, 2H)        blockdiag(wa2, wc2)
    misc_ref : (8, 2H) f32     row0 = [ba1|bc1], row1 = [ba2|bc2],
                               row2 = [0 | wcl], row3 = bcl (broadcast),
                               row4 = actor-lane mask (1 on lanes [0,H))
    out_ref  : (TB, 2H)        lanes [0,H) = actor features,
                               lanes [H,2H) = value (broadcast across lanes)
    """
    w_dtype = w1_ref.dtype
    x = x_ref[...]
    b1 = misc_ref[0:1, :]
    b2 = misc_ref[1:2, :]
    wcl = misc_ref[2:3, :]
    bcl = misc_ref[3:4, :]
    actor_mask = misc_ref[4:5, :]

    # Layer 1: one 128-lane matmul + one tanh (actor lanes 0..63, critic 64..127)
    h1 = jnp.tanh(jnp.dot(x.astype(w_dtype), w1_ref[...],
                          preferred_element_type=jnp.float32) + b1)
    # Layer 2: block-diagonal fused weight -> still one matmul + one tanh
    h2 = jnp.tanh(jnp.dot(h1.astype(w_dtype), w2_ref[...],
                          preferred_element_type=jnp.float32) + b2)

    # critic_linear as VPU multiply + lane reduction (wcl is zero on actor lanes)
    vsum = jnp.sum(h2 * wcl, axis=-1, keepdims=True)          # (TB, 1)
    value_bcast = vsum + bcl                                   # (TB, 2H)

    # Lane select via precomputed mask: actor lanes keep h2, critic lanes carry
    # the broadcast value.  One unmasked, lane-dense 128-wide store.
    out_ref[...] = value_bcast + (h2 - value_bcast) * actor_mask


def fuse_params(params, obs_dim=OBS_DIM, weight_dtype=jnp.float32):
    """Pack the 11 MLPBase tensors into 3 lane-dense slabs (done once, offline).

    `weight_dtype=jnp.bfloat16` halves matmul/DMA cost for the large-batch
    path (accumulation stays f32); biases / head / mask always stay f32.
    """
    H = params["wa1"].shape[1]
    assert 2 * H == 128, (
        "lane-dense packing assumes hidden_size == 64 (2*H == 128 lanes); "
        "other sizes still work shape-wise but lose the one-vreg layout.")
    obs_pad = _round_up(obs_dim, _SUBLANE)

    w1 = jnp.zeros((obs_pad, 2 * H), jnp.float32)
    w1 = w1.at[:obs_dim, :H].set(params["wa1"])
    w1 = w1.at[:obs_dim, H:].set(params["wc1"])

    w2 = jnp.zeros((2 * H, 2 * H), jnp.float32)
    w2 = w2.at[:H, :H].set(params["wa2"])
    w2 = w2.at[H:, H:].set(params["wc2"])

    misc = jnp.zeros((_SUBLANE, 2 * H), jnp.float32)
    misc = misc.at[0, :H].set(params["ba1"][0])
    misc = misc.at[0, H:].set(params["bc1"][0])
    misc = misc.at[1, :H].set(params["ba2"][0])
    misc = misc.at[1, H:].set(params["bc2"][0])
    misc = misc.at[2, H:].set(params["wcl"][:, 0])    # critic head, critic lanes only
    misc = misc.at[3, :].set(params["bcl"][0, 0])     # bcl broadcast across lanes
    misc = misc.at[4, :H].set(1.0)                    # actor-lane mask
    return {"w1": w1.astype(weight_dtype),
            "w2": w2.astype(weight_dtype),
            "misc": misc}


@jax.jit
def policy_base_forward(inputs, rnn_hxs, masks, fused):
    """Equivalent of Policy.base(inputs, rnn_hxs, masks) for the non-recurrent
    MLPBase 'default' model.  `masks` is unused (no GRU); rnn_hxs passes
    through.  NOTE: consumers must use the sliced (value, actor_features)
    returned here — the raw (Bp, 128) kernel slab contains junk in padded rows
    and broadcast values in the critic lanes.
    """
    del masks  # only used by the recurrent (GRU) path, which is disabled here
    B, obs_dim = inputs.shape
    obs_pad, two_h = fused["w1"].shape
    H = two_h // 2

    if B > _GRIDLESS_MAX_BATCH:
        tb = _BATCH_TILE
        Bp = _round_up(B, tb)
    else:
        tb = None
        Bp = _round_up(B, _SUBLANE)

    # Single fused pad (batch -> multiple of tile, obs dim -> OBS_PAD lanes).
    x = jnp.pad(inputs.astype(jnp.float32),
                ((0, Bp - B), (0, obs_pad - obs_dim)))

    # Advisory cost so XLA schedules/overlaps this tiny custom call sensibly.
    flops = 2 * Bp * (obs_pad * two_h + two_h * two_h) + 2 * Bp * two_h
    transcendentals = 2 * Bp * two_h
    itemsize = jnp.dtype(fused["w1"].dtype).itemsize
    bytes_accessed = (4 * Bp * obs_pad + 4 * Bp * two_h + 4 * _SUBLANE * two_h
                      + itemsize * (obs_pad * two_h + two_h * two_h))
    cost = pl.CostEstimate(flops=flops, transcendentals=transcendentals,
                           bytes_accessed=bytes_accessed)

    if tb is None:
        # act()-sized batches: gridless, whole operands resident in VMEM,
        # no pipeline prologue/epilogue or double-buffering overhead.
        vmem = pl.BlockSpec(memory_space=pltpu.MemorySpace.VMEM)
        out = pl.pallas_call(
            _policy_fused_kernel,
            out_shape=jax.ShapeDtypeStruct((Bp, two_h), jnp.float32),
            in_specs=[vmem, vmem, vmem, vmem],
            out_specs=vmem,
            cost_estimate=cost,
        )(x, fused["w1"], fused["w2"], fused["misc"])
    else:
        # Large batches: 1-D batch grid, x/out streams double-buffered,
        # weights/misc resident (constant block index), batch axis parallel
        # so both TensorCores are used on v7x.
        out = pl.pallas_call(
            _policy_fused_kernel,
            out_shape=jax.ShapeDtypeStruct((Bp, two_h), jnp.float32),
            grid_spec=pltpu.PrefetchScalarGridSpec(
                num_scalar_prefetch=0,
                grid=(Bp // tb,),
                in_specs=[
                    pl.BlockSpec((tb, obs_pad), lambda i: (i, 0)),
                    pl.BlockSpec((obs_pad, two_h), lambda i: (0, 0)),
                    pl.BlockSpec((two_h, two_h), lambda i: (0, 0)),
                    pl.BlockSpec((_SUBLANE, two_h), lambda i: (0, 0)),
                ],
                out_specs=pl.BlockSpec((tb, two_h), lambda i: (i, 0)),
            ),
            compiler_params=pltpu.CompilerParams(
                dimension_semantics=("parallel",)),
            cost_estimate=cost,
        )(x, fused["w1"], fused["w2"], fused["misc"])

    actor_features = out[:B, :H]
    value = out[:B, H:H + 1]
    return value, actor_features, rnn_hxs


def _orthogonal(key, out_dim, in_dim, gain):
    """Deterministic orthogonal init (PyTorch nn.init.orthogonal_ analogue),
    returned already transposed to (in_dim, out_dim) for x @ W."""
    w = jax.nn.initializers.orthogonal(scale=gain)(key, (out_dim, in_dim),
                                                   jnp.float32)
    return jnp.transpose(w)  # (in_dim, out_dim)


def init_params(key, obs_dim=OBS_DIM, hidden=HIDDEN):
    gain = float(np.sqrt(2.0))
    ks = jax.random.split(key, 5)
    params = {
        # actor
        "wa1": _orthogonal(ks[0], hidden, obs_dim, gain),
        "ba1": jnp.zeros((1, hidden), jnp.float32),
        "wa2": _orthogonal(ks[1], hidden, hidden, gain),
        "ba2": jnp.zeros((1, hidden), jnp.float32),
        # critic
        "wc1": _orthogonal(ks[2], hidden, obs_dim, gain),
        "bc1": jnp.zeros((1, hidden), jnp.float32),
        "wc2": _orthogonal(ks[3], hidden, hidden, gain),
        "bc2": jnp.zeros((1, hidden), jnp.float32),
        # critic_linear
        "wcl": _orthogonal(ks[4], 1, hidden, gain),
        "bcl": jnp.zeros((1, 1), jnp.float32),
    }
    return params


def reference_forward(inputs, rnn_hxs, params):
    """Pure-JAX reference (mirrors the PyTorch MLPBase forward)."""
    ha = jnp.tanh(inputs @ params["wa1"] + params["ba1"])
    ha = jnp.tanh(ha @ params["wa2"] + params["ba2"])
    hc = jnp.tanh(inputs @ params["wc1"] + params["bc1"])
    hc = jnp.tanh(hc @ params["wc2"] + params["bc2"])
    value = hc @ params["wcl"] + params["bcl"]
    return value, ha, rnn_hxs


if __name__ == "__main__":
    key = jax.random.PRNGKey(0)
    k_in, k_in_big, k_param = jax.random.split(key, 3)

    params = init_params(k_param)
    fused = fuse_params(params)   # one-time packing into lane-dense f32 slabs

    # ---- act()-sized batch: gridless fast path --------------------------------
    inputs = jax.random.normal(k_in, (BATCH, OBS_DIM), jnp.float32)
    rnn_hxs = jnp.zeros((BATCH, 1), jnp.float32)   # non-recurrent => size 1
    masks = jnp.ones((BATCH, 1), jnp.float32)

    value, actor_features, rnn_hxs_out = policy_base_forward(
        inputs, rnn_hxs, masks, fused)
    jax.block_until_ready((value, actor_features, rnn_hxs_out))

    v_ref, a_ref, _ = reference_forward(inputs, rnn_hxs, params)
    np.testing.assert_allclose(np.asarray(value), np.asarray(v_ref),
                               rtol=1e-5, atol=2e-5)
    np.testing.assert_allclose(np.asarray(actor_features), np.asarray(a_ref),
                               rtol=1e-5, atol=2e-5)
    assert value.shape == (BATCH, 1)
    assert actor_features.shape == (BATCH, HIDDEN)
    assert rnn_hxs_out.shape == (BATCH, 1)

    # ---- evaluate_actions-sized batch: 1-D batch grid, parallel semantics -----
    inputs_big = jax.random.normal(k_in_big, (LARGE_BATCH, OBS_DIM), jnp.float32)
    rnn_hxs_big = jnp.zeros((LARGE_BATCH, 1), jnp.float32)
    masks_big = jnp.ones((LARGE_BATCH, 1), jnp.float32)

    value_b, actor_b, _ = policy_base_forward(
        inputs_big, rnn_hxs_big, masks_big, fused)
    jax.block_until_ready((value_b, actor_b))

    v_ref_b, a_ref_b, _ = reference_forward(inputs_big, rnn_hxs_big, params)
    np.testing.assert_allclose(np.asarray(value_b), np.asarray(v_ref_b),
                               rtol=1e-5, atol=2e-5)
    np.testing.assert_allclose(np.asarray(actor_b), np.asarray(a_ref_b),
                               rtol=1e-5, atol=2e-5)
    assert value_b.shape == (LARGE_BATCH, 1)
    assert actor_b.shape == (LARGE_BATCH, HIDDEN)

    print("KERNEL_OK")
</pallas_src>

<mosaic_0001>
module attributes {stable_mosaic.version = 11 : i64} {
  func.func @_policy_fused_kernel(%arg0: memref<8x24xf32, #tpu.memory_space<vmem>>, %arg1: memref<24x128xf32, #tpu.memory_space<vmem>>, %arg2: memref<128x128xf32, #tpu.memory_space<vmem>>, %arg3: memref<8x128xf32, #tpu.memory_space<vmem>>, %arg4: memref<8x128xf32, #tpu.memory_space<vmem>>) attributes {dimension_semantics = [], scalar_prefetch = 0 : i64, scratch_operands = 0 : i64, tpu.core_type = #tpu.core_type<tc>} {
    %c0 = arith.constant 0 : index
    %c0_0 = arith.constant 0 : index
    %0 = vector.load %arg0[%c0, %c0_0] : memref<8x24xf32, #tpu.memory_space<vmem>>, vector<8x24xf32>
    %c0_1 = arith.constant 0 : index
    %c0_2 = arith.constant 0 : index
    %1 = vector.load %arg3[%c0_1, %c0_2] : memref<8x128xf32, #tpu.memory_space<vmem>>, vector<1x128xf32>
    %c1 = arith.constant 1 : index
    %c0_3 = arith.constant 0 : index
    %2 = vector.load %arg3[%c1, %c0_3] : memref<8x128xf32, #tpu.memory_space<vmem>>, vector<1x128xf32>
    %c2 = arith.constant 2 : index
    %c0_4 = arith.constant 0 : index
    %3 = vector.load %arg3[%c2, %c0_4] : memref<8x128xf32, #tpu.memory_space<vmem>>, vector<1x128xf32>
    %c3 = arith.constant 3 : index
    %c0_5 = arith.constant 0 : index
    %4 = vector.load %arg3[%c3, %c0_5] : memref<8x128xf32, #tpu.memory_space<vmem>>, vector<1x128xf32>
    %c4 = arith.constant 4 : index
    %c0_6 = arith.constant 0 : index
    %5 = vector.load %arg3[%c4, %c0_6] : memref<8x128xf32, #tpu.memory_space<vmem>>, vector<1x128xf32>
    %c0_7 = arith.constant 0 : index
    %c0_8 = arith.constant 0 : index
    %6 = vector.load %arg1[%c0_7, %c0_8] : memref<24x128xf32, #tpu.memory_space<vmem>>, vector<24x128xf32>
    %cst = arith.constant dense<0.000000e+00> : vector<8x128xf32>
    %7 = tpu.matmul %0, %6, %cst {dimension_numbers = #tpu.dot_dimension_numbers<[1], [0], [0], [1], [0, 0, 1, 1], [], []>} : vector<8x24xf32>, vector<24x128xf32>, vector<8x128xf32> -> vector<8x128xf32>
    %8 = vector.broadcast %1 : vector<1x128xf32> to vector<8x128xf32>
    %9 = arith.addf %7, %8 : vector<8x128xf32>
    %10 = math.tanh %9 : vector<8x128xf32>
    %c0_9 = arith.constant 0 : index
    %c0_10 = arith.constant 0 : index
    %11 = vector.load %arg2[%c0_9, %c0_10] : memref<128x128xf32, #tpu.memory_space<vmem>>, vector<128x128xf32>
    %cst_11 = arith.constant dense<0.000000e+00> : vector<8x128xf32>
    %12 = tpu.matmul %10, %11, %cst_11 {dimension_numbers = #tpu.dot_dimension_numbers<[1], [0], [0], [1], [0, 0, 1, 1], [], []>} : vector<8x128xf32>, vector<128x128xf32>, vector<8x128xf32> -> vector<8x128xf32>
    %13 = vector.broadcast %2 : vector<1x128xf32> to vector<8x128xf32>
    %14 = arith.addf %12, %13 : vector<8x128xf32>
    %15 = math.tanh %14 : vector<8x128xf32>
    %16 = vector.broadcast %3 : vector<1x128xf32> to vector<8x128xf32>
    %17 = arith.mulf %15, %16 : vector<8x128xf32>
    %cst_12 = arith.constant dense<0.000000e+00> : vector<8xf32>
    %18 = vector.multi_reduction <add>, %17, %cst_12 [1] : vector<8x128xf32> to vector<8xf32>
    %19 = vector.shape_cast %18 : vector<8xf32> to vector<8x1xf32>
    %20 = vector.broadcast %19 : vector<8x1xf32> to vector<8x128xf32>
    %21 = vector.broadcast %4 : vector<1x128xf32> to vector<8x128xf32>
    %22 = arith.addf %20, %21 : vector<8x128xf32>
    %23 = arith.subf %15, %22 : vector<8x128xf32>
    %24 = vector.broadcast %5 : vector<1x128xf32> to vector<8x128xf32>
    %25 = arith.mulf %23, %24 : vector<8x128xf32>
    %26 = arith.addf %22, %25 : vector<8x128xf32>
    %c0_13 = arith.constant 0 : index
    %c0_14 = arith.constant 0 : index
    %27 = vector.load %arg4[%c0_13, %c0_14] : memref<8x128xf32, #tpu.memory_space<vmem>>, vector<8x128xf32>
    tpu.vector_store %arg4[%c0_13, %c0_14], %26 {strides = array<i32>} : memref<8x128xf32, #tpu.memory_space<vmem>>, vector<8x128xf32>,
    return
  }
}

</mosaic_0001>

<llo_original>
// kernel: policy_base_forward.1
$region0: #{policy_base_forward.1}
  #allocation0 [shape = 'u32[]', space=smem, size = 0x4, offset = 0x4, fixed_abs, tag = 'smem constant byte address 0x4 - core index']
  #allocation1 [shape = 'u32[144,128]{1,0:T(1,128)}', space=vmem, size = 0x12000, scoped, tag = 'internal scratch']
  %s0 = inlined_call_operand.vmem [shape: f32[8,24], index: 0, kind: input, shape index: {}]
  %s1 = inlined_call_operand.hbm [shape: f32[24,128], index: 1, kind: input, shape index: {}]
  %s2 = inlined_call_operand.hbm [shape: f32[128,128], index: 2, kind: input, shape index: {}]
  %s3 = inlined_call_operand.vmem [shape: f32[8,128], index: 3, kind: input, shape index: {}]
  %s4 = inlined_call_operand.vmem [shape: f32[8,128], index: 4, kind: output, shape index: {}]
  %s5 = sld [smem:[#allocation0]]
  $region34: #{policy_base_forward.1} parent=0
    _
  %s7 = ssub.s32 1, %s5
  %s8 = scalar_select 0, %s7, %s5
  $region1: #{policy_base_forward.1} parent=0
    #allocation2 [shape = 'u8[12288]{0}', space=vmem, size = 0x3000, scoped, tag = 'input window, operand 1, single buffered']
    #allocation3 [shape = 's32[1]{0}', space=sflag, size = 0x4, scoped, tag = 'scoped memory for policy_base_forward.1']
    #allocation4 [shape = 'u8[65536]{0}', space=vmem, size = 0x10000, scoped, tag = 'input window, operand 2, single buffered']
    #allocation5 [shape = 's32[1]{0}', space=sflag, size = 0x4, scoped, tag = 'scoped memory for policy_base_forward.1']
    %9 = vsyncpa [#allocation3], 0
    %10 = vsyncpa [#allocation5], 0
    // Predicated region
    $region2: #{policy_base_forward.1} parent=1 // pred_check
      _
    $region3: #{policy_base_forward.1} parent=1 // pred_check_branch
      %12 = sbr.rel (0) target = $region5
    $region4: #{policy_base_forward.1} parent=1 // pred_region
      _
    $region5: #{policy_base_forward.1} parent=1 // pred_fallthru
      _
    // Predicated region
    $region6: #{policy_base_forward.1} parent=1 // pred_check
      _
    $region7: #{policy_base_forward.1} parent=1 // pred_check_branch
      %14 = sbr.rel (0) target = $region9
    $region8: #{policy_base_forward.1} parent=1 // pred_region
      %s16 = ssub.s32 384, 384
      %17 = vsyncadd [#allocation3], %s16
      %s18 = sshll.u32 [#allocation2], 4
      %s19 = int_to_ptr.vmem [resolvable:$true] %s18
      %24 = dma.hbm_to_vmem [thread:$0]  %s1, 384, %s19, [#allocation3], 128, 128, 8
    $region9: #{policy_base_forward.1} parent=1 // pred_fallthru
      _
    // Predicated region
    $region10: #{policy_base_forward.1} parent=1 // pred_check
      _
    $region11: #{policy_base_forward.1} parent=1 // pred_check_branch
      %26 = sbr.rel (0) target = $region13
    $region12: #{policy_base_forward.1} parent=1 // pred_region
      %s28 = ssub.s32 2048, 2048
      %29 = vsyncadd [#allocation5], %s28
      %s30 = sshll.u32 [#allocation4], 4
      %s31 = int_to_ptr.vmem [resolvable:$true] %s30
      %36 = dma.hbm_to_vmem [thread:$0]  %s2, 2048, %s31, [#allocation5], 128, 128, 8
    $region13: #{policy_base_forward.1} parent=1 // pred_fallthru
      _
    // Predicated region
    $region14: #{policy_base_forward.1} parent=1 // pred_check
      _
    $region15: #{policy_base_forward.1} parent=1 // pred_check_branch
      %38 = sbr.rel (0) target = $region17
    $region16: #{policy_base_forward.1} parent=1 // pred_region
      _
    $region17: #{policy_base_forward.1} parent=1 // pred_fallthru
      _
    // Predicated region
    $region18: #{policy_base_forward.1} parent=1 // pred_check
      _
    $region19: #{policy_base_forward.1} parent=1 // pred_check_branch
      %40 = sbr.rel (0) target = $region21
    $region20: #{policy_base_forward.1} parent=1 // pred_region
      %41 = dma.done [#allocation3], 384
    $region21: #{policy_base_forward.1} parent=1 // pred_fallthru
      _
    // Predicated region
    $region22: #{policy_base_forward.1} parent=1 // pred_check
      _
    $region23: #{policy_base_forward.1} parent=1 // pred_check_branch
      %43 = sbr.rel (0) target = $region25
    $region24: #{policy_base_forward.1} parent=1 // pred_region
      %44 = dma.done [#allocation5], 2048
    $region25: #{policy_base_forward.1} parent=1 // pred_fallthru
      _
    %v45 = vld [vmem:[%s0] sm:$0xff]
    %v46 = vld [vmem:[%s3] sm:$0x1]
    %v47 = vld [vmem:[%s3 + $0x1] sm:$0x1]
    %v48 = vld [vmem:[%s3 + $0x2] sm:$0x1]
    %v49 = vld [vmem:[%s3 + $0x3] sm:$0x1]
    %v50 = vld [vmem:[%s3 + $0x4] sm:$0x1]
    %v51 = vld [vmem:[#allocation2] sm:$0xff]
    %v52 = vld [vmem:[#allocation2 + $0x8] sm:$0xff]
    %v53 = vld [vmem:[#allocation2 + $0x10] sm:$0xff]
    %v54 = vlaneseq
    %v55 = vshrl.u32 %v54, 7
    %v56 = vsub.s32 0, %v55
    %v57 = vrot.slane %v46, %v56
    %vm58 = vcmask 195584
    %v60 = vsel %vm58, %v45, 0
    %62 = vmatprep.subr.mxu0 0.0
    %63 = vmatpush1.msra.mxu0 0.0
    %64 = vmatprep.subr.mxu0 0.0
    %65 = vmatpush1.msra.mxu0 0.0
    %66 = vmatprep.subr.mxu0 0.0
    %67 = vmatpush1.msra.mxu0 0.0
    %68 = vmatprep.subr.mxu0 0.0
    %69 = vmatpush1.msra.mxu0 0.0
    %70 = vmatprep.subr.mxu0 0.0
    %71 = vmatpush1.msra.mxu0 0.0
    %72 = vmatprep.subr.mxu0 0.0
    %73 = vmatpush1.msra.mxu0 0.0
    %74 = vmatprep.subr.mxu0 0.0
    %75 = vmatpush1.msra.mxu0 0.0
    %76 = vmatprep.subr.mxu0 0.0
    %77 = vmatpush1.msra.mxu0 0.0
    %78 = vmatprep.subr.mxu0 0.0
    %79 = vmatpush1.msra.mxu0 0.0
    %80 = vmatprep.subr.mxu0 0.0
    %81 = vmatpush1.msra.mxu0 0.0
    %82 = vmatprep.subr.mxu0 0.0
    %83 = vmatpush1.msra.mxu0 0.0
    %84 = vmatprep.subr.mxu0 0.0
    %85 = vmatpush1.msra.mxu0 0.0
    %86 = vmatprep.subr.mxu0 0.0
    %87 = vmatpush1.msra.mxu0 0.0
    %88 = vmatprep.subr.mxu0 0.0
    %89 = vmatpush1.msra.mxu0 %v53
    %90 = vmatprep.subr.mxu0 0.0
    %91 = vmatpush1.msra.mxu0 %v52
    %92 = vmatprep.subr.mxu0 0.0
    %93 = vmatpush1.msra.mxu0 %v51
    %94 = vmatprep.subr.mxu0 0.0
    %95 = vmatpush2.msra.mxu0 0.0
    %96 = vmatprep.subr.mxu0 0.0
    %97 = vmatpush2.msra.mxu0 0.0
    %98 = vmatprep.subr.mxu0 0.0
    %99 = vmatpush2.msra.mxu0 0.0
    %100 = vmatprep.subr.mxu0 0.0
    %101 = vmatpush2.msra.mxu0 0.0
    %102 = vmatprep.subr.mxu0 0.0
    %103 = vmatpush2.msra.mxu0 0.0
    %104 = vmatprep.subr.mxu0 0.0
    %105 = vmatpush2.msra.mxu0 0.0
    %106 = vmatprep.subr.mxu0 0.0
    %107 = vmatpush2.msra.mxu0 0.0
    %108 = vmatprep.subr.mxu0 0.0
    %109 = vmatpush2.msra.mxu0 0.0
    %110 = vmatprep.subr.mxu0 0.0
    %111 = vmatpush2.msra.mxu0 0.0
    %112 = vmatprep.subr.mxu0 0.0
    %113 = vmatpush2.msra.mxu0 0.0
    %114 = vmatprep.subr.mxu0 0.0
    %115 = vmatpush2.msra.mxu0 0.0
    %116 = vmatprep.subr.mxu0 0.0
    %117 = vmatpush2.msra.mxu0 0.0
    %118 = vmatprep.subr.mxu0 0.0
    %119 = vmatpush2.msra.mxu0 0.0
    %120 = vmatprep.subr.mxu0 0.0
    %121 = vmatpush2.msra.mxu0 0.0
    %122 = vmatprep.subr.mxu0 0.0
    %123 = vmatpush2.msra.mxu0 0.0
    %124 = vmatprep.subr.mxu0 0.0
    %125 = vmatpush2.msra.mxu0 0.0
    %126 = vmatprep.mubr.f32.mxu0 0.0
    %127 = vmatmul.mubr.f32.gmra.mxu0 %v60
    %v128 = vpop.f32.mrf.mxu0
    %v129 = vadd.f32 %v57, %v128
    %v130 = vpop.f32.mrf.mxu0
    %131 = vdwg.mxu0
    %v132 = vtanh.pop %v129
    %v133 = vld [vmem:[#allocation4] sm:$0xff]
    %v134 = vld [vmem:[#allocation4 + $0x8] sm:$0xff]
    %v135 = vld [vmem:[#allocation4 + $0x10] sm:$0xff]
    %v136 = vld [vmem:[#allocation4 + $0x18] sm:$0xff]
    %v137 = vld [vmem:[#allocation4 + $0x20] sm:$0xff]
    %v138 = vld [vmem:[#allocation4 + $0x28] sm:$0xff]
    %v139 = vld [vmem:[#allocation4 + $0x30] sm:$0xff]
    %v140 = vld [vmem:[#allocation4 + $0x38] sm:$0xff]
    %v141 = vld [vmem:[#allocation4 + $0x40] sm:$0xff]
    %v142 = vld [vmem:[#allocation4 + $0x48] sm:$0xff]
    %v143 = vld [vmem:[#allocation4 + $0x50] sm:$0xff]
    %v144 = vld [vmem:[#allocation4 + $0x58] sm:$0xff]
    %v145 = vld [vmem:[#allocation4 + $0x60] sm:$0xff]
    %v146 = vld [vmem:[#allocation4 + $0x68] sm:$0xff]
    %v147 = vld [vmem:[#allocation4 + $0x70] sm:$0xff]
    %v148 = vld [vmem:[#allocation4 + $0x78] sm:$0xff]
    %v149 = vlaneseq
    %v150 = vshrl.u32 %v149, 7
    %v151 = vsub.s32 0, %v150
    %v152 = vrot.slane %v47, %v151
    %153 = vmatprep.subr.mxu0 0.0
    %154 = vmatpush1.msra.mxu0 %v148
    %155 = vmatprep.subr.mxu0 0.0
    %156 = vmatpush1.msra.mxu0 %v147
    %157 = vmatprep.subr.mxu0 0.0
    %158 = vmatpush1.msra.mxu0 %v146
    %159 = vmatprep.subr.mxu0 0.0
    %160 = vmatpush1.msra.mxu0 %v145
    %161 = vmatprep.subr.mxu0 0.0
    %162 = vmatpush1.msra.mxu0 %v144
    %163 = vmatprep.subr.mxu0 0.0
    %164 = vmatpush1.msra.mxu0 %v143
    %165 = vmatprep.subr.mxu0 0.0
    %166 = vmatpush1.msra.mxu0 %v142
    %167 = vmatprep.subr.mxu0 0.0
    %168 = vmatpush1.msra.mxu0 %v141
    %169 = vmatprep.subr.mxu0 0.0
    %170 = vmatpush1.msra.mxu0 %v140
    %171 = vmatprep.subr.mxu0 0.0
    %172 = vmatpush1.msra.mxu0 %v139
    %173 = vmatprep.subr.mxu0 0.0
    %174 = vmatpush1.msra.mxu0 %v138
    %175 = vmatprep.subr.mxu0 0.0
    %176 = vmatpush1.msra.mxu0 %v137
    %177 = vmatprep.subr.mxu0 0.0
    %178 = vmatpush1.msra.mxu0 %v136
    %179 = vmatprep.subr.mxu0 0.0
    %180 = vmatpush1.msra.mxu0 %v135
    %181 = vmatprep.subr.mxu0 0.0
    %182 = vmatpush1.msra.mxu0 %v134
    %183 = vmatprep.subr.mxu0 0.0
    %184 = vmatpush1.msra.mxu0 %v133
    %185 = vmatprep.subr.mxu0 0.0
    %186 = vmatpush2.msra.mxu0 0.0
    %187 = vmatprep.subr.mxu0 0.0
    %188 = vmatpush2.msra.mxu0 0.0
    %189 = vmatprep.subr.mxu0 0.0
    %190 = vmatpush2.msra.mxu0 0.0
    %191 = vmatprep.subr.mxu0 0.0
    %192 = vmatpush2.msra.mxu0 0.0
    %193 = vmatprep.subr.mxu0 0.0
    %194 = vmatpush2.msra.mxu0 0.0
    %195 = vmatprep.subr.mxu0 0.0
    %196 = vmatpush2.msra.mxu0 0.0
    %197 = vmatprep.subr.mxu0 0.0
    %198 = vmatpush2.msra.mxu0 0.0
    %199 = vmatprep.subr.mxu0 0.0
    %200 = vmatpush2.msra.mxu0 0.0
    %201 = vmatprep.subr.mxu0 0.0
    %202 = vmatpush2.msra.mxu0 0.0
    %203 = vmatprep.subr.mxu0 0.0
    %204 = vmatpush2.msra.mxu0 0.0
    %205 = vmatprep.subr.mxu0 0.0
    %206 = vmatpush2.msra.mxu0 0.0
    %207 = vmatprep.subr.mxu0 0.0
    %208 = vmatpush2.msra.mxu0 0.0
    %209 = vmatprep.subr.mxu0 0.0
    %210 = vmatpush2.msra.mxu0 0.0
    %211 = vmatprep.subr.mxu0 0.0
    %212 = vmatpush2.msra.mxu0 0.0
    %213 = vmatprep.subr.mxu0 0.0
    %214 = vmatpush2.msra.mxu0 0.0
    %215 = vmatprep.subr.mxu0 0.0
    %216 = vmatpush2.msra.mxu0 0.0
    %217 = vmatprep.mubr.f32.mxu0 0.0
    %218 = vmatmul.mubr.f32.gmra.mxu0 %v132
    %v219 = vpop.f32.mrf.mxu0
    %v220 = vadd.f32 %v152, %v219
    %v221 = vpop.f32.mrf.mxu0
    %222 = vdwg.mxu0
    %v223 = vtanh.pop %v220
    %v224 = vlaneseq
    %v225 = vshrl.u32 %v224, 7
    %v226 = vsub.s32 0, %v225
    %v227 = vrot.slane %v48, %v226
    %v228 = vmul.f32 %v223, %v227
    %229 = vadd.xlane.f32.xlu0 %v228
    %v230 = vpop.xlane.xlu0 %229
    %v231 = vlaneseq
    %v232 = vshrl.u32 %v231, 7
    %v233 = vsub.s32 0, %v232
    %v234 = vrot.slane %v49, %v233
    %v235 = vadd.f32 %v230, %v234
    %v236 = vsub.f32 %v223, %v235
    %v237 = vlaneseq
    %v238 = vshrl.u32 %v237, 7
    %v239 = vsub.s32 0, %v238
    %v240 = vrot.slane %v50, %v239
    %v241 = vmul.f32 %v236, %v240
    %v242 = vadd.f32 %v235, %v241
    %243 = vst [vmem:[%s4] sm:$0xff] %v242
    // Predicated region
    $region26: #{policy_base_forward.1} parent=1 // pred_check
      _
    $region27: #{policy_base_forward.1} parent=1 // pred_check_branch
      %245 = sbr.rel (0) target = $region29
    $region28: #{policy_base_forward.1} parent=1 // pred_region
      _
    $region29: #{policy_base_forward.1} parent=1 // pred_fallthru
      _
    // Predicated region
    $region30: #{policy_base_forward.1} parent=1 // pred_check
      _
    $region31: #{policy_base_forward.1} parent=1 // pred_check_branch
      %247 = sbr.rel (0) target = $region33
    $region32: #{policy_base_forward.1} parent=1 // pred_region
      _
    $region33: #{policy_base_forward.1} parent=1 // pred_fallthru
      _
    %248 = vsyncpa [#allocation3], 1
    %249 = vsyncpa [#allocation5], 1

</llo_original>
